<compile_context>
chip_gen: v5e
topology: v5e:2x2
jax: 0.10.0
libtpu: 0.0.40
codegen_flags: <defaults>
</compile_context>

<pallas_src>
import functools

import jax
import jax.numpy as jnp
from jax.experimental import pallas as pl
from jax.experimental.pallas import tpu as pltpu

_LANES = 128
# ~4 MiB of f32 input per grid block.  Double-buffered live footprint
# (x + idx + f32 out + u8 mask) ~= 26 MiB, well under the explicit scoped-VMEM
# limit below on every generation (v7x has 64 MiB physical per TC).
_TARGET_BLOCK_BYTES = 4 * 1024 * 1024
_VMEM_LIMIT_BYTES = 48 * 1024 * 1024
# Candidate lane-dense widths (multiples of 128), widest first; picking one
# that divides the element count exactly makes the wrapper reshape a no-op.
_WIDTHS = (1024, 896, 768, 640, 512, 384, 256, 128)


def _uniform_u32(idx_u32, seed_u32):
    """Counter-based hash (lowbias32-style) -> approximately uniform uint32."""
    x = idx_u32 * jnp.uint32(0x9E3779B1) + seed_u32
    x = x ^ (x >> 16)
    x = x * jnp.uint32(0x21F0AAAD)
    x = x ^ (x >> 15)
    x = x * jnp.uint32(0x735A2D97)
    x = x ^ (x >> 15)
    return x


def _make_mask_kernel(seed_ref, x_ref, idx_ref, out_ref, mask_ref, *,
                      threshold, scale, block_elems):
    seed = seed_ref[0].astype(jnp.uint32)
    # Global element counter = per-block linear index (hoisted input, DMA'd
    # once per core) + block offset.  Wraps mod 2^32 for >= 2^32 elements,
    # which is acceptable for dropout randomness.
    base = pl.program_id(0).astype(jnp.uint32) * jnp.uint32(block_elems)
    idx = idx_ref[...].astype(jnp.uint32) + base

    bits = _uniform_u32(idx, seed)
    keep = bits < jnp.uint32(threshold)          # keep with prob (1 - p)

    x = x_ref[...]
    mask_ref[...] = keep.astype(jnp.uint8)       # 1-byte mask writeback
    out_ref[...] = jnp.where(keep, x * jnp.asarray(scale, x.dtype),
                             jnp.zeros_like(x))


def _apply_mask_kernel(x_ref, m_ref, out_ref, *, scale):
    x = x_ref[...]
    keep = m_ref[...] != 0
    out_ref[...] = jnp.where(keep, x * jnp.asarray(scale, x.dtype),
                             jnp.zeros_like(x))


def _round_up(v, m):
    return -(-v // m) * m


def _pick_width(n):
    for w in _WIDTHS:
        if n % w == 0:
            return w
    return 512  # rare pad fallback


def _slab_layout(n, itemsize):
    width = _pick_width(n)
    rows = -(-n // width)
    padded = rows * width
    target_rows = max(32, (_TARGET_BLOCK_BYTES // itemsize // width) // 32 * 32)
    if rows <= target_rows:
        if rows >= 64:
            # Split even medium slabs into >= 2 blocks so the "parallel" grid
            # axis can span both TensorCores on v7x (32-row aligned).
            block_rows = min(rows, _round_up(-(-rows // 2), 32))
        else:
            block_rows = rows                    # single full-extent block
    else:
        block_rows = target_rows                 # (32,128)-aligned stream tiles
    grid = -(-rows // block_rows)
    return width, rows, padded, block_rows, grid


@functools.lru_cache(maxsize=8)
def _block_index_array(block_rows, width):
    # Per-block row-major linear index; cached per block shape.
    return jnp.arange(block_rows * width, dtype=jnp.int32).reshape(
        block_rows, width)


def _to_slab(flat, padded, rows, width):
    n = flat.shape[0]
    if padded != n:
        # TODO(synk): handle the ragged tail with an in-kernel masked final
        # block instead of this pad (extra HBM pass); rare given _WIDTHS.
        flat = jnp.pad(flat, (0, padded - n))
    return flat.reshape(rows, width)


def _from_slab(slab, n, orig_shape):
    if slab.size == n:
        return slab.reshape(orig_shape)          # free (contiguous) reshape
    return slab.reshape(-1)[:n].reshape(orig_shape)


class ConsistentDropout:
    """JAX/Pallas port of ConsistentDropout (training forward in Pallas).

    The mask is returned as uint8 (0/1) rather than torch.bool: Pallas TPU
    kernels cannot emit bool arrays, and a wrapper-side astype(bool) would add
    a full extra HBM pass on this memory-bound op.  uint8 0/1 behaves
    identically when reused via `x * mask * scale_factor`.
    """

    def __init__(self, p=0.5):
        self.p = float(p)
        # p == 1.0 is legal in torch; scale is irrelevant when all is dropped.
        self.scale_factor = 1.0 / (1.0 - self.p) if self.p < 1.0 else 0.0
        self.training = True

    def __call__(self, x, mask=None, seed=0):
        if not self.training:
            return x
        if mask is None:
            return self._forward_make_mask(x, seed)
        return self._forward_with_mask(x, mask), mask

    # --- training, mask=None: generate mask + apply dropout in one pass ----
    def _forward_make_mask(self, x, seed):
        if self.p <= 0.0:  # exact keep-all
            return x, jnp.ones(x.shape, dtype=jnp.uint8)

        orig_shape = x.shape
        flat = x.reshape(-1)
        n = flat.shape[0]
        width, rows, padded, block_rows, grid = _slab_layout(
            n, flat.dtype.itemsize)
        slab = _to_slab(flat, padded, rows, width)
        idx_block = _block_index_array(block_rows, width)

        threshold = min(int(round((1.0 - self.p) * 4294967296.0)), 4294967295)
        kernel = functools.partial(_make_mask_kernel, threshold=threshold,
                                   scale=self.scale_factor,
                                   block_elems=block_rows * width)
        seed_arr = jnp.asarray([seed], dtype=jnp.int32)

        itemsize = slab.dtype.itemsize
        cost = pl.CostEstimate(flops=16 * padded, transcendentals=0,
                               bytes_accessed=2 * padded * itemsize + padded)

        out_slab, mask_slab = pl.pallas_call(
            kernel,
            out_shape=(jax.ShapeDtypeStruct((rows, width), slab.dtype),
                       jax.ShapeDtypeStruct((rows, width), jnp.uint8)),
            grid_spec=pltpu.PrefetchScalarGridSpec(
                num_scalar_prefetch=1,
                grid=(grid,),
                in_specs=[pl.BlockSpec((block_rows, width),
                                       lambda i, s: (i, 0)),
                          # Constant block index -> DMA'd once per core, then
                          # reused (copy elided when block index is unchanged).
                          pl.BlockSpec((block_rows, width),
                                       lambda i, s: (0, 0))],
                out_specs=[pl.BlockSpec((block_rows, width),
                                        lambda i, s: (i, 0)),
                           pl.BlockSpec((block_rows, width),
                                        lambda i, s: (i, 0))],
            ),
            compiler_params=pltpu.CompilerParams(
                dimension_semantics=("parallel",),
                vmem_limit_bytes=_VMEM_LIMIT_BYTES),
            cost_estimate=cost,
        )(seed_arr, slab, idx_block)

        out = _from_slab(out_slab, n, orig_shape)
        mask = _from_slab(mask_slab, n, orig_shape)
        return out, mask

    # --- training, mask supplied: consistent reuse of the same mask --------
    def _forward_with_mask(self, x, mask):
        orig_shape = x.shape
        flat = x.reshape(-1)
        n = flat.shape[0]
        width, rows, padded, block_rows, grid = _slab_layout(
            n, flat.dtype.itemsize)
        slab = _to_slab(flat, padded, rows, width)

        mask = jnp.asarray(mask)
        if mask.dtype == jnp.bool_:
            # Pallas TPU can't ingest bool arrays; masks made by this module
            # are already uint8, so this cast only runs for foreign masks.
            mask = mask.astype(jnp.uint8)
        m_slab = _to_slab(mask.reshape(-1), padded, rows, width)

        kernel = functools.partial(_apply_mask_kernel, scale=self.scale_factor)
        itemsize = slab.dtype.itemsize
        cost = pl.CostEstimate(flops=2 * padded, transcendentals=0,
                               bytes_accessed=2 * padded * itemsize + padded)

        out_slab = pl.pallas_call(
            kernel,
            out_shape=jax.ShapeDtypeStruct((rows, width), slab.dtype),
            grid_spec=pltpu.PrefetchScalarGridSpec(
                num_scalar_prefetch=0,
                grid=(grid,),
                in_specs=[pl.BlockSpec((block_rows, width), lambda i: (i, 0)),
                          pl.BlockSpec((block_rows, width), lambda i: (i, 0))],
                out_specs=pl.BlockSpec((block_rows, width), lambda i: (i, 0)),
            ),
            compiler_params=pltpu.CompilerParams(
                dimension_semantics=("parallel",),
                vmem_limit_bytes=_VMEM_LIMIT_BYTES),
            cost_estimate=cost,
        )(slab, m_slab)

        return _from_slab(out_slab, n, orig_shape)


if __name__ == "__main__":
    key = jax.random.PRNGKey(0)
    x = jax.random.normal(key, (2, 4, 16, 16), dtype=jnp.float32)  # NCHW

    module = ConsistentDropout(p=0.5)
    scale = module.scale_factor

    # Path 1: training, mask=None -> kernel generates mask + applies dropout.
    out, mask = module(x, mask=None, seed=1234)
    out = jax.block_until_ready(out)
    mask = jax.block_until_ready(mask)

    assert out.shape == x.shape and mask.shape == x.shape
    assert mask.dtype == jnp.uint8
    assert bool(jnp.all((mask == 0) | (mask == 1)))
    expected = x * mask.astype(x.dtype) * scale
    assert jnp.allclose(out, expected, atol=1e-6)
    # Dropped positions must be exactly zero.
    assert bool(jnp.all(jnp.where(mask == 1, True, out == 0.0)))
    # Keep rate should be roughly 1 - p.
    keep_rate = float(jnp.mean(mask.astype(jnp.float32)))
    assert 0.3 < keep_rate < 0.7, keep_rate

    # Determinism: same seed -> same mask ("consistent" dropout).
    _, mask_b = module(x, mask=None, seed=1234)
    assert jnp.array_equal(jax.block_until_ready(mask_b), mask)

    # Path 2: training, mask supplied -> consistent reuse (no wrapper casts).
    out2, mask2 = module(x, mask=mask)
    out2 = jax.block_until_ready(out2)
    assert jnp.allclose(out2, expected, atol=1e-6)
    assert mask2 is mask

    # Also accepts a bool mask coming from elsewhere.
    out3, _ = module(x, mask=(mask == 1))
    assert jnp.allclose(jax.block_until_ready(out3), expected, atol=1e-6)

    # Path 3: eval mode -> identity.
    module.training = False
    out_eval = jax.block_until_ready(module(x))
    assert jnp.array_equal(out_eval, x)

    print("KERNEL_OK")
</pallas_src>

<mosaic_0001>
module attributes {stable_mosaic.version = 11 : i64} {
  func.func @_make_mask_kernel(%arg0: i32, %arg1: memref<1xi32, #tpu.memory_space<smem>>, %arg2: memref<2x1024xf32, #tpu.memory_space<vmem>>, %arg3: memref<2x1024xi32, #tpu.memory_space<vmem>>, %arg4: memref<2x1024xf32, #tpu.memory_space<vmem>>, %arg5: memref<2x1024xi8, #tpu.memory_space<vmem>>) attributes {dimension_semantics = [#tpu.dimension_semantics<parallel>], iteration_bounds = array<i64: 1>, scalar_prefetch = 1 : i64, scratch_operands = 0 : i64, tpu.core_type = #tpu.core_type<tc>, window_params = [{transform_indices = @transform_0, window_bounds = array<i64: 2, 1024>}, {pipeline_mode = #tpu.pipeline_mode<synchronous>, transform_indices = @transform_1, window_bounds = array<i64: 2, 1024>}, {transform_indices = @transform_2, window_bounds = array<i64: 2, 1024>}, {transform_indices = @transform_3, window_bounds = array<i64: 2, 1024>}]} {
    %c0 = arith.constant 0 : index
    %0 = memref.load %arg1[%c0] : memref<1xi32, #tpu.memory_space<smem>>
    %c2048_i32 = arith.constant 2048 : i32
    %1 = arith.muli %arg0, %c2048_i32 : i32
    %c0_0 = arith.constant 0 : index
    %c0_1 = arith.constant 0 : index
    %2 = vector.load %arg3[%c0_0, %c0_1] : memref<2x1024xi32, #tpu.memory_space<vmem>>, vector<2x1024xi32>
    %3 = vector.broadcast %1 : i32 to vector<2x1024xi32>
    %4 = arith.addi %2, %3 : vector<2x1024xi32>
    %c-1640531535_i32 = arith.constant -1640531535 : i32
    %5 = vector.broadcast %c-1640531535_i32 : i32 to vector<2x1024xi32>
    %6 = arith.muli %4, %5 : vector<2x1024xi32>
    %7 = vector.broadcast %0 : i32 to vector<2x1024xi32>
    %8 = arith.addi %6, %7 : vector<2x1024xi32>
    %c16_i32 = arith.constant 16 : i32
    %9 = vector.broadcast %c16_i32 : i32 to vector<2x1024xi32>
    %10 = arith.shrui %8, %9 : vector<2x1024xi32>
    %11 = arith.xori %8, %10 : vector<2x1024xi32>
    %c569420461_i32 = arith.constant 569420461 : i32
    %12 = vector.broadcast %c569420461_i32 : i32 to vector<2x1024xi32>
    %13 = arith.muli %11, %12 : vector<2x1024xi32>
    %c15_i32 = arith.constant 15 : i32
    %14 = vector.broadcast %c15_i32 : i32 to vector<2x1024xi32>
    %15 = arith.shrui %13, %14 : vector<2x1024xi32>
    %16 = arith.xori %13, %15 : vector<2x1024xi32>
    %c1935289751_i32 = arith.constant 1935289751 : i32
    %17 = vector.broadcast %c1935289751_i32 : i32 to vector<2x1024xi32>
    %18 = arith.muli %16, %17 : vector<2x1024xi32>
    %c15_i32_2 = arith.constant 15 : i32
    %19 = vector.broadcast %c15_i32_2 : i32 to vector<2x1024xi32>
    %20 = arith.shrui %18, %19 : vector<2x1024xi32>
    %21 = arith.xori %18, %20 : vector<2x1024xi32>
    %c-2147483648_i32 = arith.constant -2147483648 : i32
    %22 = vector.broadcast %c-2147483648_i32 : i32 to vector<2x1024xi32>
    %23 = arith.cmpi ult, %21, %22 : vector<2x1024xi32>
    %c0_3 = arith.constant 0 : index
    %c0_4 = arith.constant 0 : index
    %24 = vector.load %arg2[%c0_3, %c0_4] : memref<2x1024xf32, #tpu.memory_space<vmem>>, vector<2x1024xf32>
    %25 = arith.extui %23 : vector<2x1024xi1> to vector<2x1024xi8>
    %c0_5 = arith.constant 0 : index
    %c0_6 = arith.constant 0 : index
    %26 = vector.load %arg5[%c0_5, %c0_6] : memref<2x1024xi8, #tpu.memory_space<vmem>>, vector<2x1024xi8>
    tpu.vector_store %arg5[%c0_5, %c0_6], %25 {strides = array<i32>} : memref<2x1024xi8, #tpu.memory_space<vmem>>, vector<2x1024xi8>,
    %cst = arith.constant 2.000000e+00 : f32
    %27 = vector.broadcast %cst : f32 to vector<2x1024xf32>
    %28 = arith.mulf %24, %27 : vector<2x1024xf32>
    %cst_7 = arith.constant 0.000000e+00 : f32
    %29 = vector.broadcast %cst_7 : f32 to vector<2x1024xf32>
    %30 = arith.select %23, %28, %29 : vector<2x1024xi1>, vector<2x1024xf32>
    %c0_8 = arith.constant 0 : index
    %c0_9 = arith.constant 0 : index
    %31 = vector.load %arg4[%c0_8, %c0_9] : memref<2x1024xf32, #tpu.memory_space<vmem>>, vector<2x1024xf32>
    tpu.vector_store %arg4[%c0_8, %c0_9], %30 {strides = array<i32>} : memref<2x1024xf32, #tpu.memory_space<vmem>>, vector<2x1024xf32>,
    return
  }
  func.func @transform_0(%arg0: i32, %arg1: memref<1xi32, #tpu.memory_space<smem>>) -> (i32, i32) {
    %c0_i32 = arith.constant 0 : i32
    %c0_i32_0 = arith.constant 0 : i32
    return %arg0, %c0_i32 : i32, i32
  }
  func.func @transform_1(%arg0: i32, %arg1: memref<1xi32, #tpu.memory_space<smem>>) -> (i32, i32) {
    %c0_i32 = arith.constant 0 : i32
    %c0_i32_0 = arith.constant 0 : i32
    %c0_i32_1 = arith.constant 0 : i32
    return %c0_i32, %c0_i32_0 : i32, i32
  }
  func.func @transform_2(%arg0: i32, %arg1: memref<1xi32, #tpu.memory_space<smem>>) -> (i32, i32) {
    %c0_i32 = arith.constant 0 : i32
    %c0_i32_0 = arith.constant 0 : i32
    return %arg0, %c0_i32 : i32, i32
  }
  func.func @transform_3(%arg0: i32, %arg1: memref<1xi32, #tpu.memory_space<smem>>) -> (i32, i32) {
    %c0_i32 = arith.constant 0 : i32
    %c0_i32_0 = arith.constant 0 : i32
    return %arg0, %c0_i32 : i32, i32
  }
}

</mosaic_0001>

<llo_original>
// kernel: tpu_custom_call.1
$region0: #{tpu_custom_call.1}
  #allocation0 [shape = 'u32[]', space=smem, size = 0x4, offset = 0x4, fixed_abs, tag = 'smem constant byte address 0x4 - core index']
  #allocation1 [shape = 'u32[72,128]{1,0:T(1,128)}', space=vmem, size = 0x9000, scoped, tag = 'internal scratch']
  #allocation2 [shape = 's32[1]{0}', space=sflag, size = 0x4, scoped, tag = 'scoped memory for tpu_custom_call.1']
  #allocation3 [shape = 's32[1]{0:T(128)S(6)}', space=smem, size = 0x200, scoped, tag = 'prefetched SMEM operand 0']
  %s0 = inlined_call_operand.<no memory space> [shape: s32[1], index: 0, kind: input, shape index: {}]
  %s1 = inlined_call_operand.hbm [shape: f32[2,1024], index: 1, kind: input, shape index: {}]
  %s2 = inlined_call_operand.hbm [shape: s32[2,1024], index: 2, kind: input, shape index: {}]
  %s3 = inlined_call_operand.hbm [shape: f32[2,1024], index: 3, kind: output, shape index: {0}]
  %s4 = inlined_call_operand.hbm [shape: u8[2,1024], index: 4, kind: output, shape index: {1}]
  %5 = xla_tuple %s3, %s4
  %s6 = sld [smem:[#allocation0]]
  $region34: #{tpu_custom_call.1} parent=0
    _
  %s8 = ssub.s32 1, %s6
  %s9 = scalar_select 0, %s8, %s6
  %10 = sst [smem:[#allocation3]] %s0
  $region1: #{tpu_custom_call.1} parent=0
    #allocation4 [shape = 'u8[8192]{0}', space=vmem, size = 0x2000, scoped, tag = 'input window, operand 1, single buffered']
    #allocation5 [shape = 's32[1]{0}', space=sflag, size = 0x4, scoped, tag = 'scoped memory for tpu_custom_call.1']
    #allocation6 [shape = 's32[1]{0}', space=sflag, size = 0x4, scoped, tag = 'scoped memory for tpu_custom_call.1']
    #allocation7 [shape = 'u8[8192]{0}', space=vmem, size = 0x2000, scoped, tag = 'input window, operand 2, single buffered']
    #allocation8 [shape = 's32[1]{0}', space=sflag, size = 0x4, scoped, tag = 'scoped memory for tpu_custom_call.1']
    #allocation9 [shape = 'u8[8192]{0}', space=vmem, size = 0x2000, scoped, tag = 'output window, operand 0, single buffered']
    #allocation10 [shape = 'u8[4096]{0}', space=vmem, size = 0x1000, scoped, tag = 'output window, operand 1, single buffered']
    #allocation11 [shape = 's32[1]{0}', space=sflag, size = 0x4, scoped, tag = 'scoped memory for tpu_custom_call.1']
    %11 = vsyncpa [#allocation5], 0
    %12 = vsyncpa [#allocation8], 0
    %13 = vsyncpa [#allocation6], 0
    %14 = vsyncpa [#allocation11], 0
    // Predicated region
    $region2: #{tpu_custom_call.1} parent=1 // pred_check
      _
    $region3: #{tpu_custom_call.1} parent=1 // pred_check_branch
      %16 = sbr.rel (0) target = $region5
    $region4: #{tpu_custom_call.1} parent=1 // pred_region
      %18 = vsyncadd [#allocation5], 0
      %s20 = sshll.u32 %s1, 4
      %s21 = int_to_ptr.hbm [resolvable:$true] %s20
      %s22 = sshll.u32 [#allocation4], 4
      %s23 = int_to_ptr.vmem [resolvable:$true] %s22
      %25 = dma.hbm_to_vmem [thread:$0]  %s21, 256, %s23, [#allocation5]
    $region5: #{tpu_custom_call.1} parent=1 // pred_fallthru
      _
    // Predicated region
    $region6: #{tpu_custom_call.1} parent=1 // pred_check
      _
    $region7: #{tpu_custom_call.1} parent=1 // pred_check_branch
      %27 = sbr.rel (0) target = $region9
    $region8: #{tpu_custom_call.1} parent=1 // pred_region
      %29 = vsyncadd [#allocation8], 0
      %s31 = sshll.u32 %s2, 4
      %s32 = int_to_ptr.hbm [resolvable:$true] %s31
      %s33 = sshll.u32 [#allocation7], 4
      %s34 = int_to_ptr.vmem [resolvable:$true] %s33
      %36 = dma.hbm_to_vmem [thread:$0]  %s32, 256, %s34, [#allocation8]
    $region9: #{tpu_custom_call.1} parent=1 // pred_fallthru
      _
    // Predicated region
    $region10: #{tpu_custom_call.1} parent=1 // pred_check
      _
    $region11: #{tpu_custom_call.1} parent=1 // pred_check_branch
      %38 = sbr.rel (0) target = $region13
    $region12: #{tpu_custom_call.1} parent=1 // pred_region
      %40 = dma.done [#allocation5], 256
    $region13: #{tpu_custom_call.1} parent=1 // pred_fallthru
      _
    // Predicated region
    $region14: #{tpu_custom_call.1} parent=1 // pred_check
      _
    $region15: #{tpu_custom_call.1} parent=1 // pred_check_branch
      %42 = sbr.rel (0) target = $region17
    $region16: #{tpu_custom_call.1} parent=1 // pred_region
      %44 = dma.done [#allocation8], 256
    $region17: #{tpu_custom_call.1} parent=1 // pred_fallthru
      _
    %s47 = sld [smem:[#allocation3]]
    %s48 = smul.u32 0, 2048
    %v49 = vld [vmem:[#allocation7] sm:$0xff]
    %v50 = vld [vmem:[#allocation7 + $0x8] sm:$0xff]
    %v51 = vstv %s48
    %v52 = vadd.s32 %v49, %v51
    %v53 = vadd.s32 %v50, %v51
    %v54 = vmul.u32 %v52, 2654435761
    %v55 = vmul.u32 %v53, 2654435761
    %v56 = vstv %s47
    %v57 = vadd.s32 %v54, %v56
    %v58 = vadd.s32 %v55, %v56
    %v59 = vshrl.u32 %v57, 16
    %v60 = vshrl.u32 %v58, 16
    %v61 = vxor.u32 %v57, %v59
    %v62 = vxor.u32 %v58, %v60
    %v63 = vmul.u32 %v61, 569420461
    %v64 = vmul.u32 %v62, 569420461
    %v65 = vshrl.u32 %v63, 15
    %v66 = vshrl.u32 %v64, 15
    %v67 = vxor.u32 %v63, %v65
    %v68 = vxor.u32 %v64, %v66
    %v69 = vmul.u32 %v67, 1935289751
    %v70 = vmul.u32 %v68, 1935289751
    %v71 = vshrl.u32 %v69, 15
    %v72 = vshrl.u32 %v70, 15
    %v73 = vxor.u32 %v69, %v71
    %v74 = vxor.u32 %v70, %v72
    %v75 = vadd.s32 %v73, 2147483648
    %vm77 = vcmp.lt.s32.totalorder %v75, 0
    %v78 = vadd.s32 %v74, 2147483648
    %vm80 = vcmp.lt.s32.totalorder %v78, 0
    %v81 = vld [vmem:[#allocation4] sm:$0xff]
    %v82 = vld [vmem:[#allocation4 + $0x8] sm:$0xff]
    %v83 = vsel %vm77, 1, 0
    %v84 = vsel %vm80, 1, 0
    %85 = vst [vmem:[#allocation1] ss:$2 sm:$0xff] %v83
    %s86 = scalar_lea.vmem [#allocation1], 16
    %87 = vst [vmem:[%s86] ss:$2 sm:$0xff] %v84
    %v88 = vld.sshfl [vmem:[#allocation1] sm:$0xff pattern:$0x75643120]
    %v89 = vld.sshfl [vmem:[#allocation1 + $0x8] sm:$0xff pattern:$0x75643120]
    %v90 = vld.sshfl [vmem:[#allocation1 + $0x10] sm:$0xff pattern:$0x75643120]
    %v91 = vld.sshfl [vmem:[#allocation1 + $0x18] sm:$0xff pattern:$0x75643120]
    %vm92 = vcmp.ne.s32.totalorder %v88, 0
    %vm93 = vcmp.ne.s32.totalorder %v89, 0
    %vm94 = vcmp.ne.s32.totalorder %v90, 0
    %vm95 = vcmp.ne.s32.totalorder %v91, 0
    %v96 = vsel %vm92, 1, 0
    %v97 = vsel %vm93, 1, 0
    %v98 = vsel %vm94, 1, 0
    %v99 = vsel %vm95, 1, 0
    %v100 = vpack.c.b16 %v97, %v96
    %v101 = vpack.c.b16 %v99, %v98
    %v102 = vpack.c.b8 %v101, %v100
    %vm103 = vnez %v102
    %v104 = vsel %vm103, 16843009, 0
    %106 = vst [vmem:[#allocation1] ss:$9 sm:$0xff] %v104
    %v107 = vld [vmem:[#allocation1] sm:$0xff]
    %v109 = vld [vmem:[#allocation1 + $0x9] sm:$0xff]
    %v111 = vld [vmem:[#allocation1 + $0x12] sm:$0xff]
    %v113 = vld [vmem:[#allocation1 + $0x1b] sm:$0xff]
    %v115 = vld [vmem:[#allocation1 + $0x24] sm:$0xff]
    %v117 = vld [vmem:[#allocation1 + $0x2d] sm:$0xff]
    %v119 = vld [vmem:[#allocation1 + $0x36] sm:$0xff]
    %v121 = vld [vmem:[#allocation1 + $0x3f] sm:$0xff]
    %vm123 = vnez %v107
    %vm124 = vnez %v109
    %vm125 = vnez %v111
    %vm126 = vnez %v113
    %vm127 = vnez %v115
    %vm128 = vnez %v117
    %vm129 = vnez %v119
    %vm130 = vnez %v121
    %v131 = vsel %vm123, 16843009, 0
    %v132 = vsel %vm124, 16843009, 0
    %v133 = vsel %vm125, 16843009, 0
    %v134 = vsel %vm126, 16843009, 0
    %v135 = vsel %vm127, 16843009, 0
    %v136 = vsel %vm128, 16843009, 0
    %v137 = vsel %vm129, 16843009, 0
    %v138 = vsel %vm130, 16843009, 0
    %v139 = vrot.slane %v132, 7
    %v140 = vrot.slane %v133, 6
    %v141 = vrot.slane %v134, 5
    %v142 = vrot.slane %v135, 4
    %v143 = vrot.slane %v136, 3
    %v144 = vrot.slane %v137, 2
    %v145 = vrot.slane %v138, 1
    %vm146 = vcmask 1040384
    %v149 = vsel %vm146, %v131, %v139
    %vm150 = vcmask 1042434
    %v153 = vsel %vm150, %v140, %v141
    %vm154 = vcmask 1041408
    %v155 = vsel %vm154, %v149, %v153
    %vm156 = vcmask 1044484
    %v159 = vsel %vm156, %v142, %v143
    %vm160 = vcmask 1046534
    %v163 = vsel %vm160, %v144, %v145
    %vm164 = vcmask 1045508
    %v165 = vsel %vm164, %v159, %v163
    %vm166 = vcmask 1043456
    %v167 = vsel %vm166, %v155, %v165
    %vm169 = vcmask 1040384
    %vm170 = vsmask.f32 256
    %vm171 = vmand %vm169, %vm170
    %vm172 = vcmask 1041409
    %vm173 = vsmask.f32 1280
    %vm174 = vmand %vm172, %vm173
    %vm175 = vmor %vm174, %vm171
    %vm176 = vcmask 1042434
    %vm177 = vsmask.f32 2304
    %vm178 = vmand %vm176, %vm177
    %vm179 = vmor %vm178, %vm175
    %vm180 = vcmask 1043459
    %vm181 = vsmask.f32 3328
    %vm182 = vmand %vm180, %vm181
    %vm183 = vmor %vm182, %vm179
    %vm184 = vcmask 1044484
    %vm185 = vsmask.f32 4352
    %vm186 = vmand %vm184, %vm185
    %vm187 = vmor %vm186, %vm183
    %vm188 = vcmask 1045509
    %vm189 = vsmask.f32 5376
    %vm190 = vmand %vm188, %vm189
    %vm191 = vmor %vm190, %vm187
    %vm192 = vcmask 1046534
    %vm193 = vsmask.f32 6400
    %vm194 = vmand %vm192, %vm193
    %vm195 = vmor %vm194, %vm191
    %vm196 = vcmask 1047559
    %vm197 = vsmask.f32 7424
    %vm198 = vmand %vm196, %vm197
    %vm199 = vmor %vm198, %vm195
    %v200 = vld [vmem:[#allocation10] sm:$0xff]
    %v201 = vsel %vm199, %v167, %v200
    %202 = vst [vmem:[#allocation10] sm:$0xff] %v201
    %v203 = vmul.f32 %v81, 2.0
    %v204 = vmul.f32 %v82, 2.0
    %v205 = vsel %vm77, %v203, 0.0
    %v206 = vsel %vm80, %v204, 0.0
    %207 = vst [vmem:[#allocation9] sm:$0xff] %v205
    %208 = vst [vmem:[#allocation9 + $0x8] sm:$0xff] %v206
    // Predicated region
    $region18: #{tpu_custom_call.1} parent=1 // pred_check
      _
    $region19: #{tpu_custom_call.1} parent=1 // pred_check_branch
      %210 = sbr.rel (0) target = $region21
    $region20: #{tpu_custom_call.1} parent=1 // pred_region
      %212 = vsyncadd [#allocation6], 0
      %s214 = sshll.u32 [#allocation9], 4
      %s215 = int_to_ptr.vmem [resolvable:$true] %s214
      %s216 = sshll.u32 %s3, 4
      %s217 = int_to_ptr.hbm [resolvable:$true] %s216
      %219 = dma.vmem_to_hbm [thread:$0]  %s215, 256, %s217, [#allocation6]
    $region21: #{tpu_custom_call.1} parent=1 // pred_fallthru
      _
    // Predicated region
    $region22: #{tpu_custom_call.1} parent=1 // pred_check
      _
    $region23: #{tpu_custom_call.1} parent=1 // pred_check_branch
      %221 = sbr.rel (0) target = $region25
    $region24: #{tpu_custom_call.1} parent=1 // pred_region
      %223 = vsyncadd [#allocation11], 0
      %s225 = sshll.u32 [#allocation10], 4
      %s226 = int_to_ptr.vmem [resolvable:$true] %s225
      %s227 = sshll.u32 %s4, 4
      %s228 = int_to_ptr.hbm [resolvable:$true] %s227
      %230 = dma.vmem_to_hbm [thread:$0]  %s226, 128, %s228, [#allocation11]
    $region25: #{tpu_custom_call.1} parent=1 // pred_fallthru
      _
    // Predicated region
    $region26: #{tpu_custom_call.1} parent=1 // pred_check
      _
    $region27: #{tpu_custom_call.1} parent=1 // pred_check_branch
      %232 = sbr.rel (0) target = $region29
    $region28: #{tpu_custom_call.1} parent=1 // pred_region
      %234 = dma.done [#allocation6], 256
    $region29: #{tpu_custom_call.1} parent=1 // pred_fallthru
      _
    // Predicated region
    $region30: #{tpu_custom_call.1} parent=1 // pred_check
      _
    $region31: #{tpu_custom_call.1} parent=1 // pred_check_branch
      %236 = sbr.rel (0) target = $region33
    $region32: #{tpu_custom_call.1} parent=1 // pred_region
      %238 = dma.done [#allocation11], 128
    $region33: #{tpu_custom_call.1} parent=1 // pred_fallthru
      _
    %239 = vsyncpa [#allocation5], 1
    %240 = vsyncpa [#allocation8], 1
    %241 = vsyncpa [#allocation6], 1
    %242 = vsyncpa [#allocation11], 1

</llo_original>
